<compile_context>
chip_gen: v5e
topology: v5e:2x2
jax: 0.10.0
libtpu: 0.0.40
codegen_flags: <defaults>
</compile_context>

<pallas_src>
import jax
import jax.numpy as jnp
from jax.experimental import pallas as pl
from jax.experimental.pallas import tpu as pltpu

EPS = 1e-5


# ----------------------------- Pallas kernels ------------------------------ #

def _mm_kernel(px_ref, w_ref, h_ref):
    """h = patches @ W   (bf16 operands, f32 accumulation)."""
    h_ref[...] = jnp.dot(px_ref[...], w_ref[...],
                         preferred_element_type=jnp.float32)


def _mm_shortcut_kernel(px_ref, w_ref, sx_ref, wsc_ref, h_ref, sc_ref):
    """h = patches @ W1 ; sc = x_strided @ Wsc (1x1 projection shortcut)."""
    h_ref[...] = jnp.dot(px_ref[...], w_ref[...],
                         preferred_element_type=jnp.float32)
    sc_ref[...] = jnp.dot(sx_ref[...], wsc_ref[...],
                          preferred_element_type=jnp.float32)


def _mm_residual_kernel(ph_ref, w_ref, sc_ref, scale_ref, bias_ref, out_ref):
    """out = patches @ W2 + sc * scale + bias   (fused BN-of-shortcut + residual)."""
    out_ref[...] = (jnp.dot(ph_ref[...], w_ref[...],
                            preferred_element_type=jnp.float32)
                    + sc_ref[...] * scale_ref[...] + bias_ref[...])


# ------------------------------- helpers ----------------------------------- #

def _round_up(x, m):
    return (x + m - 1) // m * m


def _pad_cols(a, width):
    return jnp.pad(a, ((0, 0), (0, width - a.shape[1])))


def _pad_rows(a, rows):
    return jnp.pad(a, ((0, rows - a.shape[0]), (0, 0)))


def _choose_tile_m(M, k_dims, cp, budget_bytes=12 * 1024 * 1024):
    """Largest row tile (multiple of 8, capped at 256) fitting a VMEM budget with
    double-buffered bf16 inputs + f32 outputs.  Conservative for v7x's 64 MiB."""
    for tm in (256, 128, 64, 32, 16, 8):
        need = max(2 * (tm * k * 2) + 4 * (tm * cp * 4) for k in k_dims)
        if tm <= _round_up(M, 8) and need <= budget_bytes:
            return tm
    return 8


def _extract_patches(a_nhwc, stride):
    """3x3, padding=1 im2col of an already pre-activated tensor.
    Returns (N*Ho*Wo, 9*C), Ho, Wo.  Zero pad ring is exactly the conv's padding."""
    N, H, W, C = a_nhwc.shape
    Ho = (H + 2 - 3) // stride + 1
    Wo = (W + 2 - 3) // stride + 1
    ap = jnp.pad(a_nhwc, ((0, 0), (1, 1), (1, 1), (0, 0)))
    taps = []
    for ky in range(3):
        for kx in range(3):
            taps.append(ap[:, ky:ky + stride * (Ho - 1) + 1:stride,
                           kx:kx + stride * (Wo - 1) + 1:stride, :])
    p = jnp.stack(taps, axis=3)                       # (N, Ho, Wo, 9, C)
    return p.reshape(N * Ho * Wo, 9 * C), Ho, Wo


def _bn_fold_train(x_nhwc, gamma, beta, eps=EPS):
    """Training-mode BatchNorm2d folded to per-channel scale/bias (biased variance)."""
    mean = jnp.mean(x_nhwc, axis=(0, 1, 2))
    var = jnp.mean((x_nhwc - mean) ** 2, axis=(0, 1, 2))
    scale = gamma / jnp.sqrt(var + eps)
    bias = beta - mean * scale
    return scale, bias


# ------------------------------- forward ----------------------------------- #

def resblock18_forward(x_nchw, params, stride):
    N, Cin, H, W = x_nchw.shape
    Cout = params['w1'].shape[0]
    projection = (stride != 1) or (Cin != Cout)
    CP = _round_up(Cout, 128)                         # lane-dense output width

    x = jnp.transpose(x_nchw, (0, 2, 3, 1)).astype(jnp.float32)   # NHWC

    # -------- stage 1: a1 = relu(bn1(x));  h1 = conv1(a1);  sc = 1x1 conv(x) --------
    s1, b1 = _bn_fold_train(x, params['bn1_gamma'], params['bn1_beta'])
    a1 = jnp.maximum(x * s1 + b1, 0.0)                # pre-activate BEFORE im2col (no mask)
    px, Ho, Wo = _extract_patches(a1, stride)         # (M, 9*Cin)
    M = N * Ho * Wo
    K1, K2 = 9 * Cin, 9 * Cout

    TM = _choose_tile_m(M, (K1, K2), CP)
    Mp = _round_up(M, TM)
    grid = (Mp // TM,)

    def row_spec(k):
        return pl.BlockSpec((TM, k), lambda i: (i, 0))

    def res_spec(shape):
        return pl.BlockSpec(shape, lambda i: (0, 0))

    cparams = pltpu.CompilerParams(
        dimension_semantics=("parallel",),
        vmem_limit_bytes=32 * 1024 * 1024,
    )

    w1 = jnp.transpose(params['w1'], (2, 3, 1, 0)).reshape(K1, Cout)
    w1p = _pad_cols(w1, CP).astype(jnp.bfloat16)
    pxp = _pad_rows(px, Mp).astype(jnp.bfloat16)

    if projection:
        sx = x[:, ::stride, ::stride, :].reshape(M, Cin)          # 1x1 stride-s sampling
        sxp = _pad_rows(sx, Mp).astype(jnp.bfloat16)
        wsc = params['wsc'].reshape(Cout, Cin).T                  # (Cin, Cout)
        wscp = _pad_cols(wsc, CP).astype(jnp.bfloat16)

        h1p, scp = pl.pallas_call(
            _mm_shortcut_kernel,
            out_shape=(jax.ShapeDtypeStruct((Mp, CP), jnp.float32),
                       jax.ShapeDtypeStruct((Mp, CP), jnp.float32)),
            grid=grid,
            in_specs=[row_spec(K1), res_spec((K1, CP)),
                      row_spec(Cin), res_spec((Cin, CP))],
            out_specs=(row_spec(CP), row_spec(CP)),
            compiler_params=cparams,
        )(pxp, w1p, sxp, wscp)
    else:
        h1p = pl.pallas_call(
            _mm_kernel,
            out_shape=jax.ShapeDtypeStruct((Mp, CP), jnp.float32),
            grid=grid,
            in_specs=[row_spec(K1), res_spec((K1, CP))],
            out_specs=row_spec(CP),
            compiler_params=cparams,
        )(pxp, w1p)
        scp = None                                    # identity shortcut: no matmul at all

    # -------- stage 2: a2 = relu(bn2(h1));  out = conv2(a2) + bn_sc(shortcut) --------
    h1 = h1p[:M, :Cout].reshape(N, Ho, Wo, Cout)
    s2, b2 = _bn_fold_train(h1, params['bn2_gamma'], params['bn2_beta'])
    a2 = jnp.maximum(h1 * s2 + b2, 0.0)
    ph, _, _ = _extract_patches(a2, 1)                # (M, 9*Cout)

    w2 = jnp.transpose(params['w2'], (2, 3, 1, 0)).reshape(K2, Cout)
    w2p = _pad_cols(w2, CP).astype(jnp.bfloat16)
    php = _pad_rows(ph, Mp).astype(jnp.bfloat16)

    if projection:
        sc_img = scp[:M, :Cout].reshape(N, Ho, Wo, Cout)
        ss, sb = _bn_fold_train(sc_img, params['bnsc_gamma'], params['bnsc_beta'])
        sc_in = scp                                   # already (Mp, CP) f32
    else:
        ss = jnp.ones((Cout,), jnp.float32)
        sb = jnp.zeros((Cout,), jnp.float32)
        sc_in = _pad_rows(_pad_cols(x.reshape(M, Cout), CP), Mp)   # raw input, f32

    sc_scale = _pad_cols(ss.reshape(1, Cout).astype(jnp.float32), CP)
    sc_bias = _pad_cols(sb.reshape(1, Cout).astype(jnp.float32), CP)

    outp = pl.pallas_call(
        _mm_residual_kernel,
        out_shape=jax.ShapeDtypeStruct((Mp, CP), jnp.float32),
        grid=grid,
        in_specs=[row_spec(K2), res_spec((K2, CP)),
                  row_spec(CP), res_spec((1, CP)), res_spec((1, CP))],
        out_specs=row_spec(CP),
        input_output_aliases={2: 0},                  # write result over the shortcut buffer
        compiler_params=cparams,
    )(php, w2p, sc_in, sc_scale, sc_bias)

    out = outp[:M, :Cout].reshape(N, Ho, Wo, Cout)
    return jnp.transpose(out, (0, 3, 1, 2))           # back to NCHW


# ------------------------- deterministic parameters ------------------------ #

def init_params(key, in_channels, out_channels, stride):
    ks = jax.random.split(key, 8)
    fan1 = in_channels * 9
    fan2 = out_channels * 9
    params = {
        'w1': jax.random.normal(ks[0], (out_channels, in_channels, 3, 3),
                                jnp.float32) * (2.0 / fan1) ** 0.5,
        'w2': jax.random.normal(ks[1], (out_channels, out_channels, 3, 3),
                                jnp.float32) * (2.0 / fan2) ** 0.5,
        'bn1_gamma': jax.random.uniform(ks[2], (in_channels,), jnp.float32, 0.5, 1.5),
        'bn1_beta': jax.random.normal(ks[3], (in_channels,), jnp.float32) * 0.1,
        'bn2_gamma': jax.random.uniform(ks[4], (out_channels,), jnp.float32, 0.5, 1.5),
        'bn2_beta': jax.random.normal(ks[5], (out_channels,), jnp.float32) * 0.1,
    }
    if stride != 1 or in_channels != out_channels:
        params['wsc'] = jax.random.normal(ks[6], (out_channels, in_channels, 1, 1),
                                          jnp.float32) * (2.0 / in_channels) ** 0.5
        params['bnsc_gamma'] = jax.random.uniform(ks[7], (out_channels,),
                                                  jnp.float32, 0.5, 1.5)
        params['bnsc_beta'] = jnp.zeros((out_channels,), jnp.float32)
    return params


# -------------------------- pure-JAX reference ----------------------------- #

def _reference(x_nchw, params, stride):
    def bn(x, g, b):
        mean = jnp.mean(x, axis=(0, 2, 3), keepdims=True)
        var = jnp.mean((x - mean) ** 2, axis=(0, 2, 3), keepdims=True)
        return ((x - mean) / jnp.sqrt(var + EPS) * g.reshape(1, -1, 1, 1)
                + b.reshape(1, -1, 1, 1))

    def conv(x, w, s, p):
        return jax.lax.conv_general_dilated(
            x, w, (s, s), [(p, p), (p, p)],
            dimension_numbers=('NCHW', 'OIHW', 'NCHW'))

    out = conv(jnp.maximum(bn(x_nchw, params['bn1_gamma'], params['bn1_beta']), 0.),
               params['w1'], stride, 1)
    out = conv(jnp.maximum(bn(out, params['bn2_gamma'], params['bn2_beta']), 0.),
               params['w2'], 1, 1)
    if 'wsc' in params:
        sc = bn(conv(x_nchw, params['wsc'], stride, 0),
                params['bnsc_gamma'], params['bnsc_beta'])
    else:
        sc = x_nchw
    return out + sc


# ---------------------------------- main ----------------------------------- #

if __name__ == "__main__":
    key = jax.random.PRNGKey(0)
    kx1, kx2, kp1, kp2 = jax.random.split(key, 4)

    # bf16 matmul operands (f32 accumulation) -> compare at a bf16-appropriate tolerance.
    TOL = 3e-2

    # Config A: projection shortcut (in=4 -> out=8, stride=2), NCHW input.
    x_a = jax.random.normal(kx1, (2, 4, 16, 16), jnp.float32)
    p_a = init_params(kp1, 4, 8, 2)
    y_a = resblock18_forward(x_a, p_a, stride=2)
    jax.block_until_ready(y_a)
    assert y_a.shape == (2, 8, 8, 8)
    r_a = _reference(x_a, p_a, 2)
    assert jnp.allclose(y_a, r_a, rtol=TOL, atol=TOL), \
        f"config A mismatch, max err {jnp.max(jnp.abs(y_a - r_a)):.4f}"

    # Config B: identity shortcut (in=out=8, stride=1).
    x_b = jax.random.normal(kx2, (2, 8, 16, 16), jnp.float32)
    p_b = init_params(kp2, 8, 8, 1)
    y_b = resblock18_forward(x_b, p_b, stride=1)
    jax.block_until_ready(y_b)
    assert y_b.shape == (2, 8, 16, 16)
    r_b = _reference(x_b, p_b, 1)
    assert jnp.allclose(y_b, r_b, rtol=TOL, atol=TOL), \
        f"config B mismatch, max err {jnp.max(jnp.abs(y_b - r_b)):.4f}"

    print("KERNEL_OK")
</pallas_src>

<mosaic_0001>
module attributes {stable_mosaic.version = 11 : i64} {
  func.func @_mm_shortcut_kernel(%arg0: i32, %arg1: memref<128x36xbf16, #tpu.memory_space<vmem>>, %arg2: memref<36x128xbf16, #tpu.memory_space<vmem>>, %arg3: memref<128x4xbf16, #tpu.memory_space<vmem>>, %arg4: memref<4x128xbf16, #tpu.memory_space<vmem>>, %arg5: memref<128x128xf32, #tpu.memory_space<vmem>>, %arg6: memref<128x128xf32, #tpu.memory_space<vmem>>) attributes {dimension_semantics = [#tpu.dimension_semantics<parallel>], iteration_bounds = array<i64: 1>, scalar_prefetch = 0 : i64, scratch_operands = 0 : i64, tpu.core_type = #tpu.core_type<tc>, window_params = [{transform_indices = @transform_0, window_bounds = array<i64: 128, 36>}, {pipeline_mode = #tpu.pipeline_mode<synchronous>, transform_indices = @transform_1, window_bounds = array<i64: 36, 128>}, {transform_indices = @transform_2, window_bounds = array<i64: 128, 4>}, {pipeline_mode = #tpu.pipeline_mode<synchronous>, transform_indices = @transform_3, window_bounds = array<i64: 4, 128>}, {transform_indices = @transform_4, window_bounds = array<i64: 128, 128>}, {transform_indices = @transform_5, window_bounds = array<i64: 128, 128>}]} {
    %c0 = arith.constant 0 : index
    %c0_0 = arith.constant 0 : index
    %0 = vector.load %arg1[%c0, %c0_0] : memref<128x36xbf16, #tpu.memory_space<vmem>>, vector<128x36xbf16>
    %c0_1 = arith.constant 0 : index
    %c0_2 = arith.constant 0 : index
    %1 = vector.load %arg2[%c0_1, %c0_2] : memref<36x128xbf16, #tpu.memory_space<vmem>>, vector<36x128xbf16>
    %cst = arith.constant dense<0.000000e+00> : vector<128x128xf32>
    %2 = tpu.matmul %0, %1, %cst {dimension_numbers = #tpu.dot_dimension_numbers<[1], [0], [0], [1], [0, 0, 1, 1], [], []>} : vector<128x36xbf16>, vector<36x128xbf16>, vector<128x128xf32> -> vector<128x128xf32>
    %c0_3 = arith.constant 0 : index
    %c0_4 = arith.constant 0 : index
    %3 = vector.load %arg5[%c0_3, %c0_4] : memref<128x128xf32, #tpu.memory_space<vmem>>, vector<128x128xf32>
    tpu.vector_store %arg5[%c0_3, %c0_4], %2 {strides = array<i32>} : memref<128x128xf32, #tpu.memory_space<vmem>>, vector<128x128xf32>,
    %c0_5 = arith.constant 0 : index
    %c0_6 = arith.constant 0 : index
    %4 = vector.load %arg3[%c0_5, %c0_6] : memref<128x4xbf16, #tpu.memory_space<vmem>>, vector<128x4xbf16>
    %c0_7 = arith.constant 0 : index
    %c0_8 = arith.constant 0 : index
    %5 = vector.load %arg4[%c0_7, %c0_8] : memref<4x128xbf16, #tpu.memory_space<vmem>>, vector<4x128xbf16>
    %cst_9 = arith.constant dense<0.000000e+00> : vector<128x128xf32>
    %6 = tpu.matmul %4, %5, %cst_9 {dimension_numbers = #tpu.dot_dimension_numbers<[1], [0], [0], [1], [0, 0, 1, 1], [], []>} : vector<128x4xbf16>, vector<4x128xbf16>, vector<128x128xf32> -> vector<128x128xf32>
    %c0_10 = arith.constant 0 : index
    %c0_11 = arith.constant 0 : index
    %7 = vector.load %arg6[%c0_10, %c0_11] : memref<128x128xf32, #tpu.memory_space<vmem>>, vector<128x128xf32>
    tpu.vector_store %arg6[%c0_10, %c0_11], %6 {strides = array<i32>} : memref<128x128xf32, #tpu.memory_space<vmem>>, vector<128x128xf32>,
    return
  }
  func.func @transform_0(%arg0: i32) -> (i32, i32) {
    %c0_i32 = arith.constant 0 : i32
    %c0_i32_0 = arith.constant 0 : i32
    return %arg0, %c0_i32 : i32, i32
  }
  func.func @transform_1(%arg0: i32) -> (i32, i32) {
    %c0_i32 = arith.constant 0 : i32
    %c0_i32_0 = arith.constant 0 : i32
    %c0_i32_1 = arith.constant 0 : i32
    return %c0_i32, %c0_i32_0 : i32, i32
  }
  func.func @transform_2(%arg0: i32) -> (i32, i32) {
    %c0_i32 = arith.constant 0 : i32
    %c0_i32_0 = arith.constant 0 : i32
    return %arg0, %c0_i32 : i32, i32
  }
  func.func @transform_3(%arg0: i32) -> (i32, i32) {
    %c0_i32 = arith.constant 0 : i32
    %c0_i32_0 = arith.constant 0 : i32
    %c0_i32_1 = arith.constant 0 : i32
    return %c0_i32, %c0_i32_0 : i32, i32
  }
  func.func @transform_4(%arg0: i32) -> (i32, i32) {
    %c0_i32 = arith.constant 0 : i32
    %c0_i32_0 = arith.constant 0 : i32
    return %arg0, %c0_i32 : i32, i32
  }
  func.func @transform_5(%arg0: i32) -> (i32, i32) {
    %c0_i32 = arith.constant 0 : i32
    %c0_i32_0 = arith.constant 0 : i32
    return %arg0, %c0_i32 : i32, i32
  }
}

</mosaic_0001>

<llo_original>
// kernel: tpu_custom_call.1
$region0: #{tpu_custom_call.1}
  #allocation0 [shape = 'u32[]', space=smem, size = 0x4, offset = 0x4, fixed_abs, tag = 'smem constant byte address 0x4 - core index']
  #allocation1 [shape = 'u32[72,128]{1,0:T(1,128)}', space=vmem, size = 0x9000, scoped, tag = 'internal scratch']
  %s0 = inlined_call_operand.vmem [shape: bf16[128,36], index: 0, kind: input, shape index: {}]
  %s1 = inlined_call_operand.vmem [shape: bf16[36,128], index: 1, kind: input, shape index: {}]
  %s2 = inlined_call_operand.vmem [shape: bf16[128,4], index: 2, kind: input, shape index: {}]
  %s3 = inlined_call_operand.vmem [shape: bf16[4,128], index: 3, kind: input, shape index: {}]
  %s4 = inlined_call_operand.hbm [shape: f32[128,128], index: 4, kind: output, shape index: {0}]
  %s5 = inlined_call_operand.hbm [shape: f32[128,128], index: 5, kind: output, shape index: {1}]
  %6 = xla_tuple %s4, %s5
  %s7 = sld [smem:[#allocation0]]
  $region34: #{tpu_custom_call.1} parent=0
    _
  %s9 = ssub.s32 1, %s7
  %s10 = scalar_select 0, %s9, %s7
  $region1: #{tpu_custom_call.1} parent=0
    #allocation2 [shape = 'u8[65536]{0}', space=vmem, size = 0x10000, scoped, tag = 'output window, operand 0, single buffered']
    #allocation3 [shape = 's32[1]{0}', space=sflag, size = 0x4, scoped, tag = 'scoped memory for tpu_custom_call.1']
    #allocation4 [shape = 'u8[65536]{0}', space=vmem, size = 0x10000, scoped, tag = 'output window, operand 1, single buffered']
    #allocation5 [shape = 's32[1]{0}', space=sflag, size = 0x4, scoped, tag = 'scoped memory for tpu_custom_call.1']
    %11 = vsyncpa [#allocation3], 0
    %12 = vsyncpa [#allocation5], 0
    // Predicated region
    $region2: #{tpu_custom_call.1} parent=1 // pred_check
      _
    $region3: #{tpu_custom_call.1} parent=1 // pred_check_branch
      %14 = sbr.rel (0) target = $region5
    $region4: #{tpu_custom_call.1} parent=1 // pred_region
      _
    $region5: #{tpu_custom_call.1} parent=1 // pred_fallthru
      _
    // Predicated region
    $region6: #{tpu_custom_call.1} parent=1 // pred_check
      _
    $region7: #{tpu_custom_call.1} parent=1 // pred_check_branch
      %16 = sbr.rel (0) target = $region9
    $region8: #{tpu_custom_call.1} parent=1 // pred_region
      _
    $region9: #{tpu_custom_call.1} parent=1 // pred_fallthru
      _
    // Predicated region
    $region10: #{tpu_custom_call.1} parent=1 // pred_check
      _
    $region11: #{tpu_custom_call.1} parent=1 // pred_check_branch
      %18 = sbr.rel (0) target = $region13
    $region12: #{tpu_custom_call.1} parent=1 // pred_region
      _
    $region13: #{tpu_custom_call.1} parent=1 // pred_fallthru
      _
    // Predicated region
    $region14: #{tpu_custom_call.1} parent=1 // pred_check
      _
    $region15: #{tpu_custom_call.1} parent=1 // pred_check_branch
      %20 = sbr.rel (0) target = $region17
    $region16: #{tpu_custom_call.1} parent=1 // pred_region
      _
    $region17: #{tpu_custom_call.1} parent=1 // pred_fallthru
      _
    %v22 = vld [vmem:[%s0] sm:$0xf]
    %v23 = vld [vmem:[%s0 + $0x4] sm:$0xf]
    %v24 = vld [vmem:[%s0 + $0x8] sm:$0xf]
    %v25 = vld [vmem:[%s0 + $0xc] sm:$0xf]
    %v26 = vld [vmem:[%s0 + $0x10] sm:$0xf]
    %v27 = vld [vmem:[%s0 + $0x14] sm:$0xf]
    %v28 = vld [vmem:[%s0 + $0x18] sm:$0xf]
    %v29 = vld [vmem:[%s0 + $0x1c] sm:$0xf]
    %v30 = vld [vmem:[%s0 + $0x20] sm:$0xf]
    %v31 = vld [vmem:[%s0 + $0x24] sm:$0xf]
    %v32 = vld [vmem:[%s0 + $0x28] sm:$0xf]
    %v33 = vld [vmem:[%s0 + $0x2c] sm:$0xf]
    %v34 = vld [vmem:[%s0 + $0x30] sm:$0xf]
    %v35 = vld [vmem:[%s0 + $0x34] sm:$0xf]
    %v36 = vld [vmem:[%s0 + $0x38] sm:$0xf]
    %v37 = vld [vmem:[%s0 + $0x3c] sm:$0xf]
    %v38 = vld [vmem:[%s1] sm:$0xf]
    %v39 = vld [vmem:[%s1 + $0x4] sm:$0xf]
    %v40 = vld [vmem:[%s1 + $0x8] sm:$0xf]
    %v41 = vld [vmem:[%s1 + $0xc] sm:$0xf]
    %v42 = vld [vmem:[%s1 + $0x10] sm:$0x3]
    %v59 = vunpack.c.l.b16 %v22
    %v60 = vunpack.c.l.b16 %v23
    %v61 = vunpack.c.l.b16 %v24
    %v62 = vunpack.c.l.b16 %v25
    %v63 = vunpack.c.l.b16 %v26
    %v64 = vunpack.c.l.b16 %v27
    %v65 = vunpack.c.l.b16 %v28
    %v66 = vunpack.c.l.b16 %v29
    %v67 = vunpack.c.l.b16 %v30
    %v68 = vunpack.c.l.b16 %v31
    %v69 = vunpack.c.l.b16 %v32
    %v70 = vunpack.c.l.b16 %v33
    %v71 = vunpack.c.l.b16 %v34
    %v72 = vunpack.c.l.b16 %v35
    %v73 = vunpack.c.l.b16 %v36
    %v74 = vunpack.c.l.b16 %v37
    %v75 = vpack.c.b16 %v60, %v59
    %v76 = vpack.c.b16 %v62, %v61
    %v77 = vpack.c.b16 %v64, %v63
    %v78 = vpack.c.b16 %v66, %v65
    %v79 = vpack.c.b16 %v68, %v67
    %v80 = vpack.c.b16 %v70, %v69
    %v81 = vpack.c.b16 %v72, %v71
    %v82 = vpack.c.b16 %v74, %v73
    %v88 = vunpack.c.l.b16 %v38
    %v89 = vunpack.c.l.b16 %v39
    %v90 = vunpack.c.l.b16 %v40
    %v91 = vunpack.c.l.b16 %v41
    %v92 = vunpack.c.l.b16 %v42
    %v93 = vpack.c.b16 %v89, %v88
    %v94 = vpack.c.b16 %v91, %v90
    %v95 = vpack.c.b16 %v92, %v92
    %vm98 = vcmask 293888
    %v100 = vsel %vm98, %v75, 0
    %v103 = vsel %vm98, %v76, 0
    %v106 = vsel %vm98, %v77, 0
    %v109 = vsel %vm98, %v78, 0
    %v112 = vsel %vm98, %v79, 0
    %v115 = vsel %vm98, %v80, 0
    %v118 = vsel %vm98, %v81, 0
    %v121 = vsel %vm98, %v82, 0
    %vm123 = vcmask 1041408
    %v125 = vsel %vm123, %v95, 0
    %127 = vmatpush.bf16.msra.mxu0 0
    %128 = vmatpush.bf16.msra.mxu0 0
    %129 = vmatpush.bf16.msra.mxu0 0
    %130 = vmatpush.bf16.msra.mxu0 0
    %131 = vmatpush.bf16.msra.mxu0 0
    %132 = vmatpush.bf16.msra.mxu0 %v125
    %133 = vmatpush.bf16.msra.mxu0 %v94
    %134 = vmatpush.bf16.msra.mxu0 %v93
    %135 = vmatmul.bf16.gmra.mxu0 %v100
    %v136 = vpop.f32.mrf.mxu0
    %v137 = vadd.f32 0.0, %v136
    %v138 = vpop.f32.mrf.mxu0
    %v139 = vadd.f32 0.0, %v138
    %140 = vmatmul.bf16.gmra.mxu0 %v103
    %v141 = vpop.f32.mrf.mxu0
    %v142 = vadd.f32 0.0, %v141
    %v143 = vpop.f32.mrf.mxu0
    %v144 = vadd.f32 0.0, %v143
    %145 = vmatmul.bf16.gmra.mxu0 %v106
    %v146 = vpop.f32.mrf.mxu0
    %v147 = vadd.f32 0.0, %v146
    %v148 = vpop.f32.mrf.mxu0
    %v149 = vadd.f32 0.0, %v148
    %150 = vmatmul.bf16.gmra.mxu0 %v109
    %v151 = vpop.f32.mrf.mxu0
    %v152 = vadd.f32 0.0, %v151
    %v153 = vpop.f32.mrf.mxu0
    %v154 = vadd.f32 0.0, %v153
    %155 = vmatmul.bf16.gmra.mxu0 %v112
    %v156 = vpop.f32.mrf.mxu0
    %v157 = vadd.f32 0.0, %v156
    %v158 = vpop.f32.mrf.mxu0
    %v159 = vadd.f32 0.0, %v158
    %160 = vmatmul.bf16.gmra.mxu0 %v115
    %v161 = vpop.f32.mrf.mxu0
    %v162 = vadd.f32 0.0, %v161
    %v163 = vpop.f32.mrf.mxu0
    %v164 = vadd.f32 0.0, %v163
    %165 = vmatmul.bf16.gmra.mxu0 %v118
    %v166 = vpop.f32.mrf.mxu0
    %v167 = vadd.f32 0.0, %v166
    %v168 = vpop.f32.mrf.mxu0
    %v169 = vadd.f32 0.0, %v168
    %170 = vmatmul.bf16.gmra.mxu0 %v121
    %v171 = vpop.f32.mrf.mxu0
    %v172 = vadd.f32 0.0, %v171
    %v173 = vpop.f32.mrf.mxu0
    %v174 = vadd.f32 0.0, %v173
    %175 = vdwg.mxu0
    %176 = vst [vmem:[#allocation2] sm:$0xff] %v137
    %177 = vst [vmem:[#allocation2 + $0x8] sm:$0xff] %v139
    %178 = vst [vmem:[#allocation2 + $0x10] sm:$0xff] %v142
    %179 = vst [vmem:[#allocation2 + $0x18] sm:$0xff] %v144
    %180 = vst [vmem:[#allocation2 + $0x20] sm:$0xff] %v147
    %181 = vst [vmem:[#allocation2 + $0x28] sm:$0xff] %v149
    %182 = vst [vmem:[#allocation2 + $0x30] sm:$0xff] %v152
    %183 = vst [vmem:[#allocation2 + $0x38] sm:$0xff] %v154
    %184 = vst [vmem:[#allocation2 + $0x40] sm:$0xff] %v157
    %185 = vst [vmem:[#allocation2 + $0x48] sm:$0xff] %v159
    %186 = vst [vmem:[#allocation2 + $0x50] sm:$0xff] %v162
    %187 = vst [vmem:[#allocation2 + $0x58] sm:$0xff] %v164
    %188 = vst [vmem:[#allocation2 + $0x60] sm:$0xff] %v167
    %189 = vst [vmem:[#allocation2 + $0x68] sm:$0xff] %v169
    %190 = vst [vmem:[#allocation2 + $0x70] sm:$0xff] %v172
    %191 = vst [vmem:[#allocation2 + $0x78] sm:$0xff] %v174
    %v192 = vld [vmem:[%s2] sm:$0xf]
    %v193 = vld [vmem:[%s2 + $0x4] sm:$0xf]
    %v194 = vld [vmem:[%s2 + $0x8] sm:$0xf]
    %v195 = vld [vmem:[%s2 + $0xc] sm:$0xf]
    %v196 = vld [vmem:[%s2 + $0x10] sm:$0xf]
    %v197 = vld [vmem:[%s2 + $0x14] sm:$0xf]
    %v198 = vld [vmem:[%s2 + $0x18] sm:$0xf]
    %v199 = vld [vmem:[%s2 + $0x1c] sm:$0xf]
    %v200 = vld [vmem:[%s2 + $0x20] sm:$0xf]
    %v201 = vld [vmem:[%s2 + $0x24] sm:$0xf]
    %v202 = vld [vmem:[%s2 + $0x28] sm:$0xf]
    %v203 = vld [vmem:[%s2 + $0x2c] sm:$0xf]
    %v204 = vld [vmem:[%s2 + $0x30] sm:$0xf]
    %v205 = vld [vmem:[%s2 + $0x34] sm:$0xf]
    %v206 = vld [vmem:[%s2 + $0x38] sm:$0xf]
    %v207 = vld [vmem:[%s2 + $0x3c] sm:$0xf]
    %v208 = vld [vmem:[%s3] sm:$0x3]
    %v225 = vunpack.c.l.b16 %v192
    %v226 = vunpack.c.l.b16 %v193
    %v227 = vunpack.c.l.b16 %v194
    %v228 = vunpack.c.l.b16 %v195
    %v229 = vunpack.c.l.b16 %v196
    %v230 = vunpack.c.l.b16 %v197
    %v231 = vunpack.c.l.b16 %v198
    %v232 = vunpack.c.l.b16 %v199
    %v233 = vunpack.c.l.b16 %v200
    %v234 = vunpack.c.l.b16 %v201
    %v235 = vunpack.c.l.b16 %v202
    %v236 = vunpack.c.l.b16 %v203
    %v237 = vunpack.c.l.b16 %v204
    %v238 = vunpack.c.l.b16 %v205
    %v239 = vunpack.c.l.b16 %v206
    %v240 = vunpack.c.l.b16 %v207
    %v241 = vpack.c.b16 %v226, %v225
    %v242 = vpack.c.b16 %v228, %v227
    %v243 = vpack.c.b16 %v230, %v229
    %v244 = vpack.c.b16 %v232, %v231
    %v245 = vpack.c.b16 %v234, %v233
    %v246 = vpack.c.b16 %v236, %v235
    %v247 = vpack.c.b16 %v238, %v237
    %v248 = vpack.c.b16 %v240, %v239
    %vm249 = vcmask 31744
    %v251 = vsel %vm249, %v241, 0
    %v254 = vsel %vm249, %v242, 0
    %v257 = vsel %vm249, %v243, 0
    %v260 = vsel %vm249, %v244, 0
    %v263 = vsel %vm249, %v245, 0
    %v266 = vsel %vm249, %v246, 0
    %v269 = vsel %vm249, %v247, 0
    %v272 = vsel %vm249, %v248, 0
    %v275 = vsel %vm123, %v208, 0
    %277 = vmatpush.bf16.msra.mxu0 0
    %278 = vmatpush.bf16.msra.mxu0 0
    %279 = vmatpush.bf16.msra.mxu0 0
    %280 = vmatpush.bf16.msra.mxu0 0
    %281 = vmatpush.bf16.msra.mxu0 0
    %282 = vmatpush.bf16.msra.mxu0 0
    %283 = vmatpush.bf16.msra.mxu0 0
    %284 = vmatpush.bf16.msra.mxu0 %v275
    %285 = vmatmul.bf16.gmra.mxu0 %v251
    %v286 = vpop.f32.mrf.mxu0
    %v287 = vadd.f32 0.0, %v286
    %v288 = vpop.f32.mrf.mxu0
    %v289 = vadd.f32 0.0, %v288
    %290 = vmatmul.bf16.gmra.mxu0 %v254
    %v291 = vpop.f32.mrf.mxu0
    %v292 = vadd.f32 0.0, %v291
    %v293 = vpop.f32.mrf.mxu0
    %v294 = vadd.f32 0.0, %v293
    %295 = vmatmul.bf16.gmra.mxu0 %v257
    %v296 = vpop.f32.mrf.mxu0
    %v297 = vadd.f32 0.0, %v296
    %v298 = vpop.f32.mrf.mxu0
    %v299 = vadd.f32 0.0, %v298
    %300 = vmatmul.bf16.gmra.mxu0 %v260
    %v301 = vpop.f32.mrf.mxu0
    %v302 = vadd.f32 0.0, %v301
    %v303 = vpop.f32.mrf.mxu0
    %v304 = vadd.f32 0.0, %v303
    %305 = vmatmul.bf16.gmra.mxu0 %v263
    %v306 = vpop.f32.mrf.mxu0
    %v307 = vadd.f32 0.0, %v306
    %v308 = vpop.f32.mrf.mxu0
    %v309 = vadd.f32 0.0, %v308
    %310 = vmatmul.bf16.gmra.mxu0 %v266
    %v311 = vpop.f32.mrf.mxu0
    %v312 = vadd.f32 0.0, %v311
    %v313 = vpop.f32.mrf.mxu0
    %v314 = vadd.f32 0.0, %v313
    %315 = vmatmul.bf16.gmra.mxu0 %v269
    %v316 = vpop.f32.mrf.mxu0
    %v317 = vadd.f32 0.0, %v316
    %v318 = vpop.f32.mrf.mxu0
    %v319 = vadd.f32 0.0, %v318
    %320 = vmatmul.bf16.gmra.mxu0 %v272
    %v321 = vpop.f32.mrf.mxu0
    %v322 = vadd.f32 0.0, %v321
    %v323 = vpop.f32.mrf.mxu0
    %v324 = vadd.f32 0.0, %v323
    %325 = vdwg.mxu0
    %326 = vst [vmem:[#allocation4] sm:$0xff] %v287
    %327 = vst [vmem:[#allocation4 + $0x8] sm:$0xff] %v289
    %328 = vst [vmem:[#allocation4 + $0x10] sm:$0xff] %v292
    %329 = vst [vmem:[#allocation4 + $0x18] sm:$0xff] %v294
    %330 = vst [vmem:[#allocation4 + $0x20] sm:$0xff] %v297
    %331 = vst [vmem:[#allocation4 + $0x28] sm:$0xff] %v299
    %332 = vst [vmem:[#allocation4 + $0x30] sm:$0xff] %v302
    %333 = vst [vmem:[#allocation4 + $0x38] sm:$0xff] %v304
    %334 = vst [vmem:[#allocation4 + $0x40] sm:$0xff] %v307
    %335 = vst [vmem:[#allocation4 + $0x48] sm:$0xff] %v309
    %336 = vst [vmem:[#allocation4 + $0x50] sm:$0xff] %v312
    %337 = vst [vmem:[#allocation4 + $0x58] sm:$0xff] %v314
    %338 = vst [vmem:[#allocation4 + $0x60] sm:$0xff] %v317
    %339 = vst [vmem:[#allocation4 + $0x68] sm:$0xff] %v319
    %340 = vst [vmem:[#allocation4 + $0x70] sm:$0xff] %v322
    %341 = vst [vmem:[#allocation4 + $0x78] sm:$0xff] %v324
    // Predicated region
    $region18: #{tpu_custom_call.1} parent=1 // pred_check
      _
    $region19: #{tpu_custom_call.1} parent=1 // pred_check_branch
      %343 = sbr.rel (0) target = $region21
    $region20: #{tpu_custom_call.1} parent=1 // pred_region
      %345 = vsyncadd [#allocation3], 0
      %s346 = sshll.u32 [#allocation2], 4
      %s347 = int_to_ptr.vmem [resolvable:$true] %s346
      %s348 = sshll.u32 %s4, 4
      %s349 = int_to_ptr.hbm [resolvable:$true] %s348
      %354 = dma.vmem_to_hbm [thread:$0]  %s347, 2048, %s349, [#allocation3], 128, 128, 8
    $region21: #{tpu_custom_call.1} parent=1 // pred_fallthru
      _
    // Predicated region
    $region22: #{tpu_custom_call.1} parent=1 // pred_check
      _
    $region23: #{tpu_custom_call.1} parent=1 // pred_check_branch
      %356 = sbr.rel (0) target = $region25
    $region24: #{tpu_custom_call.1} parent=1 // pred_region
      %358 = vsyncadd [#allocation5], 0
      %s359 = sshll.u32 [#allocation4], 4
      %s360 = int_to_ptr.vmem [resolvable:$true] %s359
      %s361 = sshll.u32 %s5, 4
      %s362 = int_to_ptr.hbm [resolvable:$true] %s361
      %367 = dma.vmem_to_hbm [thread:$0]  %s360, 2048, %s362, [#allocation5], 128, 128, 8
    $region25: #{tpu_custom_call.1} parent=1 // pred_fallthru
      _
    // Predicated region
    $region26: #{tpu_custom_call.1} parent=1 // pred_check
      _
    $region27: #{tpu_custom_call.1} parent=1 // pred_check_branch
      %369 = sbr.rel (0) target = $region29
    $region28: #{tpu_custom_call.1} parent=1 // pred_region
      %371 = dma.done [#allocation3], 2048
    $region29: #{tpu_custom_call.1} parent=1 // pred_fallthru
      _
    // Predicated region
    $region30: #{tpu_custom_call.1} parent=1 // pred_check
      _
    $region31: #{tpu_custom_call.1} parent=1 // pred_check_branch
      %373 = sbr.rel (0) target = $region33
    $region32: #{tpu_custom_call.1} parent=1 // pred_region
      %375 = dma.done [#allocation5], 2048
    $region33: #{tpu_custom_call.1} parent=1 // pred_fallthru
      _
    %376 = vsyncpa [#allocation3], 1
    %377 = vsyncpa [#allocation5], 1

</llo_original>
